<compile_context>
chip_gen: v7x
topology: tpu7x:2x2x1
jax: 0.10.0
libtpu: 0.0.40
codegen_flags: <defaults>
</compile_context>

<pallas_src>
import functools

import jax
import jax.numpy as jnp
from jax.experimental import pallas as pl
from jax.experimental.pallas import tpu as pltpu


def _round_up(n, m):
    return (n + m - 1) // m * m


def _vmem_capacity_bytes():
    """Physical VMEM per TensorCore; conservative fallback if unavailable."""
    try:
        cap = getattr(pltpu.get_tpu_info(), "vmem_capacity_bytes", None)
        if cap:
            return int(cap)
    except Exception:
        pass
    return 64 * 1024 * 1024  # v7x per-TC size; safe lower bound everywhere


def _linear_kernel(x_ref, w_ref, b_ref, o_ref):
    # x_ref: (Bt, D)   w_ref: (D, Ct)   b_ref: (1, Ct) f32
    # o_ref: (Bt, Ct) block of the UNPADDED (B, C) output; out-of-bounds
    # rows/columns are masked on store, so no in-kernel slicing is needed.
    acc = jnp.dot(x_ref[...], w_ref[...], preferred_element_type=jnp.float32)
    o_ref[...] = (acc + b_ref[...]).astype(o_ref.dtype)


def _pallas_linear(x, w_p, b_p, *, B, C, D, Bt, Ct, out_dtype, vmem_limit,
                   single_buffer_weight):
    nB = pl.cdiv(B, Bt)            # ragged last batch block; no HBM pad of x
    nC = w_p.shape[1] // Ct
    # Weight / bias blocks are constant across the (inner) batch axis; a single
    # pipeline buffer halves their resident VMEM footprint.
    wb = dict(pipeline_mode=pl.Buffered(1)) if single_buffer_weight else {}
    return pl.pallas_call(
        _linear_kernel,
        out_shape=jax.ShapeDtypeStruct((B, C), out_dtype),
        grid_spec=pl.GridSpec(
            # C-block axis outer (weight stays resident while x streams),
            # batch axis inner.  Both axes are independent -> "parallel".
            grid=(nC, nB),
            in_specs=[
                pl.BlockSpec((Bt, D), lambda j, i: (i, 0)),
                pl.BlockSpec((D, Ct), lambda j, i: (0, j), **wb),
                pl.BlockSpec((1, Ct), lambda j, i: (0, j), **wb),
            ],
            out_specs=pl.BlockSpec((Bt, Ct), lambda j, i: (i, j)),
        ),
        compiler_params=pltpu.CompilerParams(
            dimension_semantics=("parallel", "parallel"),
            vmem_limit_bytes=vmem_limit,
        ),
    )(x, w_p, b_p)


def linear_classifier(x, weight, bias, *, block_b=1024,
                      compute_dtype=jnp.bfloat16):
    """Forward pass matching torch.nn.Linear(input_dim, num_classes).

    x:      (B, D)
    weight: (C, D)   -- PyTorch nn.Linear convention
    bias:   (C,)
    returns (B, C) in x's original dtype.
    """
    B, D = x.shape
    C, D2 = weight.shape
    assert D == D2
    out_dtype = x.dtype

    # bf16 operands by default (f32 accumulation in-kernel).  In a real model
    # activations already arrive in compute_dtype, so this cast is a no-op or
    # fuses into the producer.
    if compute_dtype is not None and x.dtype != compute_dtype:
        x = x.astype(compute_dtype)
    if compute_dtype is not None and weight.dtype != compute_dtype:
        weight = weight.astype(compute_dtype)

    x_size = jnp.dtype(x.dtype).itemsize
    w_size = jnp.dtype(weight.dtype).itemsize
    out_size = jnp.dtype(out_dtype).itemsize

    # ---- generation-aware VMEM budget --------------------------------------
    vmem_cap = _vmem_capacity_bytes()
    budget = int(vmem_cap * 0.65)      # ~83 MiB on v5e/v6e, ~41 MiB on v7x
    lane = 128

    # ---- class (N) tile -----------------------------------------------------
    # Largest lane-multiple Ct whose (conservatively double-buffered) weight
    # slab uses at most ~half the budget; snap to 256 for the 256-wide MXUs.
    ct_cap = (budget // 2) // max(2 * (D * w_size + 4), 1)
    ct_cap = max(lane, (ct_cap // lane) * lane)
    Ct = min(_round_up(max(C, lane), lane), ct_cap)
    if Ct >= 256:
        Ct = (Ct // 256) * 256
    # Weight/bias are zero-padded so every C block is fully in-bounds; the zero
    # columns contribute nothing, and the matching output columns are OOB in
    # the unpadded (B, C) output, hence masked on store.
    C_pad = _round_up(max(C, Ct), Ct)
    # NOTE: for very large D the (D, Ct) weight block itself may not fit VMEM;
    # that would need an extra K grid axis ("arbitrary") with an f32 VMEM
    # accumulator and pl.when init/finalize.

    # ---- batch (M) tile -----------------------------------------------------
    resident = 2 * (D * Ct * w_size + Ct * 4)            # weight + f32 bias
    per_row = 2 * (D * x_size + Ct * out_size)           # dbl-buffered x + out
    bt_cap = max(8, (budget - resident) // max(per_row, 1))
    Bt = int(min(block_b, bt_cap, _round_up(B, 8)))
    Bt = max(8, (Bt // 8) * 8)

    # ---- operand prep: only the weight/bias are transposed/padded (x streams
    # straight from HBM, output is written unpadded) --------------------------
    # NOTE: for frozen params, cache w_p / b_p (or jit this wrapper) so the
    # transpose+pad is not a per-call HBM pass over the weight.
    w_p = jnp.pad(weight.T, ((0, 0), (0, C_pad - C)))                 # (D, C_pad)
    b_p = jnp.pad(bias.astype(jnp.float32), (0, C_pad - C)).reshape(1, C_pad)

    needed = (2 * Bt * D * x_size + 2 * Bt * Ct * out_size
              + 2 * (D * Ct * w_size + Ct * 4))
    vmem_limit = int(min(int(vmem_cap * 0.9),
                         max(2 * needed + (4 << 20), 32 << 20)))

    call = functools.partial(
        _pallas_linear, x, w_p, b_p, B=B, C=C, D=D, Bt=Bt, Ct=Ct,
        out_dtype=out_dtype, vmem_limit=vmem_limit)
    try:
        out = call(single_buffer_weight=True)
        jax.block_until_ready(out)
    except Exception:
        # Some Pallas versions may reject pipeline_mode=pl.Buffered(1); fall
        # back to the default double-buffered resident weight.
        out = call(single_buffer_weight=False)
    return out


if __name__ == "__main__":
    # Deterministic synthetic params mimicking nn.Linear(input_dim, num_classes).
    input_dim = 32
    num_classes = 3
    batch = 8

    key = jax.random.PRNGKey(0)
    kx, kw, kb = jax.random.split(key, 3)

    x = jax.random.normal(kx, (batch, input_dim), dtype=jnp.float32)
    bound = 1.0 / (input_dim ** 0.5)
    weight = jax.random.uniform(kw, (num_classes, input_dim),
                                minval=-bound, maxval=bound, dtype=jnp.float32)
    bias = jax.random.uniform(kb, (num_classes,),
                              minval=-bound, maxval=bound, dtype=jnp.float32)

    ref = x @ weight.T + bias

    # Full-precision path: tight check of the kernel plumbing.
    out_f32 = linear_classifier(x, weight, bias, compute_dtype=None)
    jax.block_until_ready(out_f32)
    assert out_f32.shape == (batch, num_classes)
    assert jnp.allclose(out_f32, ref, atol=1e-5, rtol=1e-5)

    # Default bandwidth-optimized path: bf16 operands, f32 accumulation.
    out = linear_classifier(x, weight, bias)
    jax.block_until_ready(out)
    assert out.shape == (batch, num_classes)
    assert jnp.allclose(out, ref, atol=5e-2, rtol=5e-2)

    print("KERNEL_OK")
</pallas_src>

<mosaic_0001>
module attributes {stable_mosaic.version = 11 : i64} {
  func.func @_linear_kernel(%arg0: i32, %arg1: i32, %arg2: memref<8x32xf32, #tpu.memory_space<vmem>>, %arg3: memref<32x128xf32, #tpu.memory_space<vmem>>, %arg4: memref<1x128xf32, #tpu.memory_space<vmem>>, %arg5: memref<8x128xf32, #tpu.memory_space<vmem>>) attributes {dimension_semantics = [#tpu.dimension_semantics<parallel>, #tpu.dimension_semantics<parallel>], iteration_bounds = array<i64: 1, 1>, scalar_prefetch = 0 : i64, scratch_operands = 0 : i64, tpu.core_type = #tpu.core_type<tc>, window_params = [{transform_indices = @transform_0, window_bounds = array<i64: 8, 32>}, {pipeline_mode = #tpu.pipeline_mode<synchronous>, transform_indices = @transform_1, window_bounds = array<i64: 32, 128>}, {pipeline_mode = #tpu.pipeline_mode<synchronous>, transform_indices = @transform_2, window_bounds = array<i64: 1, 128>}, {transform_indices = @transform_3, window_bounds = array<i64: 8, 128>}]} {
    %c0 = arith.constant 0 : index
    %c0_0 = arith.constant 0 : index
    %0 = vector.load %arg2[%c0, %c0_0] : memref<8x32xf32, #tpu.memory_space<vmem>>, vector<8x32xf32>
    %c0_1 = arith.constant 0 : index
    %c0_2 = arith.constant 0 : index
    %1 = vector.load %arg3[%c0_1, %c0_2] : memref<32x128xf32, #tpu.memory_space<vmem>>, vector<32x128xf32>
    %cst = arith.constant dense<0.000000e+00> : vector<8x128xf32>
    %2 = tpu.matmul %0, %1, %cst {dimension_numbers = #tpu.dot_dimension_numbers<[1], [0], [0], [1], [0, 0, 1, 1], [], []>} : vector<8x32xf32>, vector<32x128xf32>, vector<8x128xf32> -> vector<8x128xf32>
    %c0_3 = arith.constant 0 : index
    %c0_4 = arith.constant 0 : index
    %3 = vector.load %arg4[%c0_3, %c0_4] : memref<1x128xf32, #tpu.memory_space<vmem>>, vector<1x128xf32>
    %4 = vector.broadcast %3 : vector<1x128xf32> to vector<8x128xf32>
    %5 = arith.addf %2, %4 : vector<8x128xf32>
    %c0_5 = arith.constant 0 : index
    %c0_6 = arith.constant 0 : index
    %6 = vector.load %arg5[%c0_5, %c0_6] : memref<8x128xf32, #tpu.memory_space<vmem>>, vector<8x128xf32>
    tpu.vector_store %arg5[%c0_5, %c0_6], %5 {strides = array<i32>} : memref<8x128xf32, #tpu.memory_space<vmem>>, vector<8x128xf32>,
    return
  }
  func.func @transform_0(%arg0: i32, %arg1: i32) -> (i32, i32) {
    %c0_i32 = arith.constant 0 : i32
    %c0_i32_0 = arith.constant 0 : i32
    return %arg1, %c0_i32 : i32, i32
  }
  func.func @transform_1(%arg0: i32, %arg1: i32) -> (i32, i32) {
    %c0_i32 = arith.constant 0 : i32
    %c0_i32_0 = arith.constant 0 : i32
    return %c0_i32, %arg0 : i32, i32
  }
  func.func @transform_2(%arg0: i32, %arg1: i32) -> (i32, i32) {
    %c0_i32 = arith.constant 0 : i32
    %c0_i32_0 = arith.constant 0 : i32
    return %c0_i32, %arg0 : i32, i32
  }
  func.func @transform_3(%arg0: i32, %arg1: i32) -> (i32, i32) {
    %c0_i32 = arith.constant 0 : i32
    return %arg1, %arg0 : i32, i32
  }
}

module attributes {stable_mosaic.version = 11 : i64} {
  func.func @_linear_kernel(%arg0: i32, %arg1: i32, %arg2: memref<8x32xf32, #tpu.memory_space<vmem>>, %arg3: memref<32x128xf32, #tpu.memory_space<vmem>>, %arg4: memref<1x128xf32, #tpu.memory_space<vmem>>, %arg5: memref<8x128xf32, #tpu.memory_space<vmem>>) attributes {dimension_semantics = [#tpu.dimension_semantics<parallel>, #tpu.dimension_semantics<parallel>], iteration_bounds = array<i64: 1, 1>, scalar_prefetch = 0 : i64, scratch_operands = 0 : i64, tpu.core_type = #tpu.core_type<tc>, window_params = [{transform_indices = @transform_0, window_bounds = array<i64: 8, 32>}, {transform_indices = @transform_1, window_bounds = array<i64: 32, 128>}, {transform_indices = @transform_2, window_bounds = array<i64: 1, 128>}, {transform_indices = @transform_3, window_bounds = array<i64: 8, 128>}]} {
    %c0 = arith.constant 0 : index
    %c0_0 = arith.constant 0 : index
    %0 = vector.load %arg2[%c0, %c0_0] : memref<8x32xf32, #tpu.memory_space<vmem>>, vector<8x32xf32>
    %c0_1 = arith.constant 0 : index
    %c0_2 = arith.constant 0 : index
    %1 = vector.load %arg3[%c0_1, %c0_2] : memref<32x128xf32, #tpu.memory_space<vmem>>, vector<32x128xf32>
    %cst = arith.constant dense<0.000000e+00> : vector<8x128xf32>
    %2 = tpu.matmul %0, %1, %cst {dimension_numbers = #tpu.dot_dimension_numbers<[1], [0], [0], [1], [0, 0, 1, 1], [], []>} : vector<8x32xf32>, vector<32x128xf32>, vector<8x128xf32> -> vector<8x128xf32>
    %c0_3 = arith.constant 0 : index
    %c0_4 = arith.constant 0 : index
    %3 = vector.load %arg4[%c0_3, %c0_4] : memref<1x128xf32, #tpu.memory_space<vmem>>, vector<1x128xf32>
    %4 = vector.broadcast %3 : vector<1x128xf32> to vector<8x128xf32>
    %5 = arith.addf %2, %4 : vector<8x128xf32>
    %c0_5 = arith.constant 0 : index
    %c0_6 = arith.constant 0 : index
    %6 = vector.load %arg5[%c0_5, %c0_6] : memref<8x128xf32, #tpu.memory_space<vmem>>, vector<8x128xf32>
    tpu.vector_store %arg5[%c0_5, %c0_6], %5 {strides = array<i32>} : memref<8x128xf32, #tpu.memory_space<vmem>>, vector<8x128xf32>,
    return
  }
  func.func @transform_0(%arg0: i32, %arg1: i32) -> (i32, i32) {
    %c0_i32 = arith.constant 0 : i32
    %c0_i32_0 = arith.constant 0 : i32
    return %arg1, %c0_i32 : i32, i32
  }
  func.func @transform_1(%arg0: i32, %arg1: i32) -> (i32, i32) {
    %c0_i32 = arith.constant 0 : i32
    %c0_i32_0 = arith.constant 0 : i32
    return %c0_i32, %arg0 : i32, i32
  }
  func.func @transform_2(%arg0: i32, %arg1: i32) -> (i32, i32) {
    %c0_i32 = arith.constant 0 : i32
    %c0_i32_0 = arith.constant 0 : i32
    return %c0_i32, %arg0 : i32, i32
  }
  func.func @transform_3(%arg0: i32, %arg1: i32) -> (i32, i32) {
    %c0_i32 = arith.constant 0 : i32
    return %arg1, %arg0 : i32, i32
  }
}

</mosaic_0001>

<llo_original>
// kernel: tpu_custom_call.1
$region0: #{tpu_custom_call.1}
  #allocation0 [shape = 'u32[]', space=smem, size = 0x4, offset = 0x4, fixed_abs, tag = 'smem constant byte address 0x4 - core index']
  #allocation1 [shape = 'u32[144,128]{1,0:T(1,128)}', space=vmem, size = 0x12000, scoped, tag = 'internal scratch']
  %s0 = inlined_call_operand.hbm [shape: f32[8,32], index: 0, kind: input, shape index: {}]
  %s1 = inlined_call_operand.hbm [shape: f32[32,128], index: 1, kind: input, shape index: {}]
  %s2 = inlined_call_operand.vmem [shape: f32[1,128], index: 2, kind: input, shape index: {}]
  %s3 = inlined_call_operand.vmem [shape: f32[8,3], index: 3, kind: output, shape index: {}]
  %s4 = sld [smem:[#allocation0]]
  $region30: #{tpu_custom_call.1} parent=0
    _
  %s6 = ssub.s32 1, %s4
  %s7 = scalar_select 0, %s6, %s4
  $region1: #{tpu_custom_call.1} parent=0
    #allocation2 [shape = 'u8[4096]{0}', space=vmem, size = 0x1000, scoped, tag = 'input window, operand 0, single buffered']
    #allocation3 [shape = 's32[1]{0}', space=sflag, size = 0x4, scoped, tag = 'scoped memory for tpu_custom_call.1']
    #allocation4 [shape = 'u8[16384]{0}', space=vmem, size = 0x4000, scoped, tag = 'input window, operand 1, single buffered']
    #allocation5 [shape = 's32[1]{0}', space=sflag, size = 0x4, scoped, tag = 'scoped memory for tpu_custom_call.1']
    %8 = vsyncpa [#allocation3], 0
    %9 = vsyncpa [#allocation5], 0
    // Predicated region
    $region2: #{tpu_custom_call.1} parent=1 // pred_check
      _
    $region3: #{tpu_custom_call.1} parent=1 // pred_check_branch
      %11 = sbr.rel (0) target = $region5
    $region4: #{tpu_custom_call.1} parent=1 // pred_region
      %s13 = ssub.s32 128, 128
      %14 = vsyncadd [#allocation3], %s13
      %s16 = sshll.u32 [#allocation2], 4
      %s17 = int_to_ptr.vmem [resolvable:$true] %s16
      %19 = dma.hbm_to_vmem [thread:$0]  %s0, 128, %s17, [#allocation3]
    $region5: #{tpu_custom_call.1} parent=1 // pred_fallthru
      _
    // Predicated region
    $region6: #{tpu_custom_call.1} parent=1 // pred_check
      _
    $region7: #{tpu_custom_call.1} parent=1 // pred_check_branch
      %21 = sbr.rel (0) target = $region9
    $region8: #{tpu_custom_call.1} parent=1 // pred_region
      %s23 = ssub.s32 512, 512
      %24 = vsyncadd [#allocation5], %s23
      %s25 = sshll.u32 [#allocation4], 4
      %s26 = int_to_ptr.vmem [resolvable:$true] %s25
      %31 = dma.hbm_to_vmem [thread:$0]  %s1, 512, %s26, [#allocation5], 128, 128, 8
    $region9: #{tpu_custom_call.1} parent=1 // pred_fallthru
      _
    // Predicated region
    $region10: #{tpu_custom_call.1} parent=1 // pred_check
      _
    $region11: #{tpu_custom_call.1} parent=1 // pred_check_branch
      %33 = sbr.rel (0) target = $region13
    $region12: #{tpu_custom_call.1} parent=1 // pred_region
      _
    $region13: #{tpu_custom_call.1} parent=1 // pred_fallthru
      _
    // Predicated region
    $region14: #{tpu_custom_call.1} parent=1 // pred_check
      _
    $region15: #{tpu_custom_call.1} parent=1 // pred_check_branch
      %35 = sbr.rel (0) target = $region17
    $region16: #{tpu_custom_call.1} parent=1 // pred_region
      %36 = dma.done [#allocation3], 128
    $region17: #{tpu_custom_call.1} parent=1 // pred_fallthru
      _
    // Predicated region
    $region18: #{tpu_custom_call.1} parent=1 // pred_check
      _
    $region19: #{tpu_custom_call.1} parent=1 // pred_check_branch
      %38 = sbr.rel (0) target = $region21
    $region20: #{tpu_custom_call.1} parent=1 // pred_region
      %39 = dma.done [#allocation5], 512
    $region21: #{tpu_custom_call.1} parent=1 // pred_fallthru
      _
    %v40 = vld [vmem:[#allocation2] sm:$0xff]
    %v41 = vld [vmem:[#allocation4] sm:$0xff]
    %v42 = vld [vmem:[#allocation4 + $0x8] sm:$0xff]
    %v43 = vld [vmem:[#allocation4 + $0x10] sm:$0xff]
    %v44 = vld [vmem:[#allocation4 + $0x18] sm:$0xff]
    %v45 = vld [vmem:[%s2] sm:$0x1]
    %v47 = vlaneseq
    %v48 = vshrl.u32 %v47, 7
    %v49 = vsub.s32 0, %v48
    %v50 = vrot.slane %v45, %v49
    %vm52 = vcmask 261120
    %v54 = vsel %vm52, %v40, 0
    %56 = vmatprep.subr.mxu0 0.0
    %57 = vmatpush1.msra.mxu0 %v41
    %58 = vmatprep.subr.mxu0 0.0
    %59 = vmatpush1.msra.mxu0 %v42
    %60 = vmatprep.subr.mxu0 0.0
    %61 = vmatpush1.msra.mxu0 %v43
    %62 = vmatprep.subr.mxu0 0.0
    %63 = vmatpush1.msra.mxu0 %v44
    %64 = vmatprep.subr.mxu0 0.0
    %65 = vmatpush1.msra.mxu0 0.0
    %66 = vmatprep.subr.mxu0 0.0
    %67 = vmatpush1.msra.mxu0 0.0
    %68 = vmatprep.subr.mxu0 0.0
    %69 = vmatpush1.msra.mxu0 0.0
    %70 = vmatprep.subr.mxu0 0.0
    %71 = vmatpush1.msra.mxu0 0.0
    %72 = vmatprep.subr.mxu0 0.0
    %73 = vmatpush1.msra.mxu0 0.0
    %74 = vmatprep.subr.mxu0 0.0
    %75 = vmatpush1.msra.mxu0 0.0
    %76 = vmatprep.subr.mxu0 0.0
    %77 = vmatpush1.msra.mxu0 0.0
    %78 = vmatprep.subr.mxu0 0.0
    %79 = vmatpush1.msra.mxu0 0.0
    %80 = vmatprep.subr.mxu0 0.0
    %81 = vmatpush1.msra.mxu0 0.0
    %82 = vmatprep.subr.mxu0 0.0
    %83 = vmatpush1.msra.mxu0 0.0
    %84 = vmatprep.subr.mxu0 0.0
    %85 = vmatpush1.msra.mxu0 0.0
    %86 = vmatprep.subr.mxu0 0.0
    %87 = vmatpush1.msra.mxu0 0.0
    %88 = vmatprep.subr.mxu0 0.0
    %89 = vmatpush1.msra.mxu0 0.0
    %90 = vmatprep.subr.mxu0 0.0
    %91 = vmatpush1.msra.mxu0 0.0
    %92 = vmatprep.subr.mxu0 0.0
    %93 = vmatpush1.msra.mxu0 0.0
    %94 = vmatprep.subr.mxu0 0.0
    %95 = vmatpush1.msra.mxu0 0.0
    %96 = vmatprep.subr.mxu0 0.0
    %97 = vmatpush1.msra.mxu0 0.0
    %98 = vmatprep.subr.mxu0 0.0
    %99 = vmatpush1.msra.mxu0 0.0
    %100 = vmatprep.subr.mxu0 0.0
    %101 = vmatpush1.msra.mxu0 0.0
    %102 = vmatprep.subr.mxu0 0.0
    %103 = vmatpush1.msra.mxu0 0.0
    %104 = vmatprep.subr.mxu0 0.0
    %105 = vmatpush1.msra.mxu0 0.0
    %106 = vmatprep.subr.mxu0 0.0
    %107 = vmatpush1.msra.mxu0 0.0
    %108 = vmatprep.subr.mxu0 0.0
    %109 = vmatpush1.msra.mxu0 0.0
    %110 = vmatprep.subr.mxu0 0.0
    %111 = vmatpush1.msra.mxu0 0.0
    %112 = vmatprep.subr.mxu0 0.0
    %113 = vmatpush1.msra.mxu0 0.0
    %114 = vmatprep.subr.mxu0 0.0
    %115 = vmatpush1.msra.mxu0 0.0
    %116 = vmatprep.subr.mxu0 0.0
    %117 = vmatpush1.msra.mxu0 0.0
    %118 = vmatprep.subr.mxu0 0.0
    %119 = vmatpush1.msra.mxu0 0.0
    %120 = vmatprep.mubr.f32.mxu0 0.0
    %121 = vmatmul.mubr.f32.gmra.mrb[0].mxu0 %v54
    %v122 = vpop.f32.mrb[0].mxu0
    %v123 = vadd.f32 %v50, %v122
    %v124 = vpop.f32.mrb[0].mxu0
    %125 = vdwg.mxu0
    %126 = vst [vmem:[%s3] sm:$0xff] %v123
    // Predicated region
    $region22: #{tpu_custom_call.1} parent=1 // pred_check
      _
    $region23: #{tpu_custom_call.1} parent=1 // pred_check_branch
      %128 = sbr.rel (0) target = $region25
    $region24: #{tpu_custom_call.1} parent=1 // pred_region
      _
    $region25: #{tpu_custom_call.1} parent=1 // pred_fallthru
      _
    // Predicated region
    $region26: #{tpu_custom_call.1} parent=1 // pred_check
      _
    $region27: #{tpu_custom_call.1} parent=1 // pred_check_branch
      %130 = sbr.rel (0) target = $region29
    $region28: #{tpu_custom_call.1} parent=1 // pred_region
      _
    $region29: #{tpu_custom_call.1} parent=1 // pred_fallthru
      _
    %131 = vsyncpa [#allocation3], 1
    %132 = vsyncpa [#allocation5], 1

// kernel: tpu_custom_call.1
$region0: #{tpu_custom_call.1}
  #allocation0 [shape = 'u32[]', space=smem, size = 0x4, offset = 0x4, fixed_abs, tag = 'smem constant byte address 0x4 - core index']
  #allocation1 [shape = 'u32[144,128]{1,0:T(1,128)}', space=vmem, size = 0x12000, scoped, tag = 'internal scratch']
  %s0 = inlined_call_operand.hbm [shape: f32[8,32], index: 0, kind: input, shape index: {}]
  %s1 = inlined_call_operand.hbm [shape: f32[32,128], index: 1, kind: input, shape index: {}]
  %s2 = inlined_call_operand.vmem [shape: f32[1,128], index: 2, kind: input, shape index: {}]
  %s3 = inlined_call_operand.vmem [shape: f32[8,3], index: 3, kind: output, shape index: {}]
  %s4 = sld [smem:[#allocation0]]
  $region30: #{tpu_custom_call.1} parent=0
    _
  %s6 = ssub.s32 1, %s4
  %s7 = scalar_select 0, %s6, %s4
  $region1: #{tpu_custom_call.1} parent=0
    #allocation2 [shape = 'u8[4096]{0}', space=vmem, size = 0x1000, scoped, tag = 'input window, operand 0, single buffered']
    #allocation3 [shape = 's32[1]{0}', space=sflag, size = 0x4, scoped, tag = 'scoped memory for tpu_custom_call.1']
    #allocation4 [shape = 'u8[16384]{0}', space=vmem, size = 0x4000, scoped, tag = 'input window, operand 1, single buffered']
    #allocation5 [shape = 's32[1]{0}', space=sflag, size = 0x4, scoped, tag = 'scoped memory for tpu_custom_call.1']
    %8 = vsyncpa [#allocation3], 0
    %9 = vsyncpa [#allocation5], 0
    // Predicated region
    $region2: #{tpu_custom_call.1} parent=1 // pred_check
      _
    $region3: #{tpu_custom_call.1} parent=1 // pred_check_branch
      %11 = sbr.rel (0) target = $region5
    $region4: #{tpu_custom_call.1} parent=1 // pred_region
      %s13 = ssub.s32 128, 128
      %14 = vsyncadd [#allocation3], %s13
      %s16 = sshll.u32 [#allocation2], 4
      %s17 = int_to_ptr.vmem [resolvable:$true] %s16
      %19 = dma.hbm_to_vmem [thread:$0]  %s0, 128, %s17, [#allocation3]
    $region5: #{tpu_custom_call.1} parent=1 // pred_fallthru
      _
    // Predicated region
    $region6: #{tpu_custom_call.1} parent=1 // pred_check
      _
    $region7: #{tpu_custom_call.1} parent=1 // pred_check_branch
      %21 = sbr.rel (0) target = $region9
    $region8: #{tpu_custom_call.1} parent=1 // pred_region
      %s23 = ssub.s32 512, 512
      %24 = vsyncadd [#allocation5], %s23
      %s25 = sshll.u32 [#allocation4], 4
      %s26 = int_to_ptr.vmem [resolvable:$true] %s25
      %31 = dma.hbm_to_vmem [thread:$0]  %s1, 512, %s26, [#allocation5], 128, 128, 8
    $region9: #{tpu_custom_call.1} parent=1 // pred_fallthru
      _
    // Predicated region
    $region10: #{tpu_custom_call.1} parent=1 // pred_check
      _
    $region11: #{tpu_custom_call.1} parent=1 // pred_check_branch
      %33 = sbr.rel (0) target = $region13
    $region12: #{tpu_custom_call.1} parent=1 // pred_region
      _
    $region13: #{tpu_custom_call.1} parent=1 // pred_fallthru
      _
    // Predicated region
    $region14: #{tpu_custom_call.1} parent=1 // pred_check
      _
    $region15: #{tpu_custom_call.1} parent=1 // pred_check_branch
      %35 = sbr.rel (0) target = $region17
    $region16: #{tpu_custom_call.1} parent=1 // pred_region
      %36 = dma.done [#allocation3], 128
    $region17: #{tpu_custom_call.1} parent=1 // pred_fallthru
      _
    // Predicated region
    $region18: #{tpu_custom_call.1} parent=1 // pred_check
      _
    $region19: #{tpu_custom_call.1} parent=1 // pred_check_branch
      %38 = sbr.rel (0) target = $region21
    $region20: #{tpu_custom_call.1} parent=1 // pred_region
      %39 = dma.done [#allocation5], 512
    $region21: #{tpu_custom_call.1} parent=1 // pred_fallthru
      _
    %v40 = vld [vmem:[#allocation2] sm:$0xff]
    %v41 = vld [vmem:[#allocation4] sm:$0xff]
    %v42 = vld [vmem:[#allocation4 + $0x8] sm:$0xff]
    %v43 = vld [vmem:[#allocation4 + $0x10] sm:$0xff]
    %v44 = vld [vmem:[#allocation4 + $0x18] sm:$0xff]
    %v45 = vld [vmem:[%s2] sm:$0x1]
    %v47 = vlaneseq
    %v48 = vshrl.u32 %v47, 7
    %v49 = vsub.s32 0, %v48
    %v50 = vrot.slane %v45, %v49
    %vm52 = vcmask 261120
    %v54 = vsel %vm52, %v40, 0
    %56 = vmatprep.subr.mxu0 0.0
    %57 = vmatpush1.msra.mxu0 %v41
    %58 = vmatprep.subr.mxu0 0.0
    %59 = vmatpush1.msra.mxu0 %v42
    %60 = vmatprep.subr.mxu0 0.0
    %61 = vmatpush1.msra.mxu0 %v43
    %62 = vmatprep.subr.mxu0 0.0
    %63 = vmatpush1.msra.mxu0 %v44
    %64 = vmatprep.subr.mxu0 0.0
    %65 = vmatpush1.msra.mxu0 0.0
    %66 = vmatprep.subr.mxu0 0.0
    %67 = vmatpush1.msra.mxu0 0.0
    %68 = vmatprep.subr.mxu0 0.0
    %69 = vmatpush1.msra.mxu0 0.0
    %70 = vmatprep.subr.mxu0 0.0
    %71 = vmatpush1.msra.mxu0 0.0
    %72 = vmatprep.subr.mxu0 0.0
    %73 = vmatpush1.msra.mxu0 0.0
    %74 = vmatprep.subr.mxu0 0.0
    %75 = vmatpush1.msra.mxu0 0.0
    %76 = vmatprep.subr.mxu0 0.0
    %77 = vmatpush1.msra.mxu0 0.0
    %78 = vmatprep.subr.mxu0 0.0
    %79 = vmatpush1.msra.mxu0 0.0
    %80 = vmatprep.subr.mxu0 0.0
    %81 = vmatpush1.msra.mxu0 0.0
    %82 = vmatprep.subr.mxu0 0.0
    %83 = vmatpush1.msra.mxu0 0.0
    %84 = vmatprep.subr.mxu0 0.0
    %85 = vmatpush1.msra.mxu0 0.0
    %86 = vmatprep.subr.mxu0 0.0
    %87 = vmatpush1.msra.mxu0 0.0
    %88 = vmatprep.subr.mxu0 0.0
    %89 = vmatpush1.msra.mxu0 0.0
    %90 = vmatprep.subr.mxu0 0.0
    %91 = vmatpush1.msra.mxu0 0.0
    %92 = vmatprep.subr.mxu0 0.0
    %93 = vmatpush1.msra.mxu0 0.0
    %94 = vmatprep.subr.mxu0 0.0
    %95 = vmatpush1.msra.mxu0 0.0
    %96 = vmatprep.subr.mxu0 0.0
    %97 = vmatpush1.msra.mxu0 0.0
    %98 = vmatprep.subr.mxu0 0.0
    %99 = vmatpush1.msra.mxu0 0.0
    %100 = vmatprep.subr.mxu0 0.0
    %101 = vmatpush1.msra.mxu0 0.0
    %102 = vmatprep.subr.mxu0 0.0
    %103 = vmatpush1.msra.mxu0 0.0
    %104 = vmatprep.subr.mxu0 0.0
    %105 = vmatpush1.msra.mxu0 0.0
    %106 = vmatprep.subr.mxu0 0.0
    %107 = vmatpush1.msra.mxu0 0.0
    %108 = vmatprep.subr.mxu0 0.0
    %109 = vmatpush1.msra.mxu0 0.0
    %110 = vmatprep.subr.mxu0 0.0
    %111 = vmatpush1.msra.mxu0 0.0
    %112 = vmatprep.subr.mxu0 0.0
    %113 = vmatpush1.msra.mxu0 0.0
    %114 = vmatprep.subr.mxu0 0.0
    %115 = vmatpush1.msra.mxu0 0.0
    %116 = vmatprep.subr.mxu0 0.0
    %117 = vmatpush1.msra.mxu0 0.0
    %118 = vmatprep.subr.mxu0 0.0
    %119 = vmatpush1.msra.mxu0 0.0
    %120 = vmatprep.mubr.f32.mxu0 0.0
    %121 = vmatmul.mubr.f32.gmra.mrb[0].mxu0 %v54
    %v122 = vpop.f32.mrb[0].mxu0
    %v123 = vadd.f32 %v50, %v122
    %v124 = vpop.f32.mrb[0].mxu0
    %125 = vdwg.mxu0
    %126 = vst [vmem:[%s3] sm:$0xff] %v123
    // Predicated region
    $region22: #{tpu_custom_call.1} parent=1 // pred_check
      _
    $region23: #{tpu_custom_call.1} parent=1 // pred_check_branch
      %128 = sbr.rel (0) target = $region25
    $region24: #{tpu_custom_call.1} parent=1 // pred_region
      _
    $region25: #{tpu_custom_call.1} parent=1 // pred_fallthru
      _
    // Predicated region
    $region26: #{tpu_custom_call.1} parent=1 // pred_check
      _
    $region27: #{tpu_custom_call.1} parent=1 // pred_check_branch
      %130 = sbr.rel (0) target = $region29
    $region28: #{tpu_custom_call.1} parent=1 // pred_region
      _
    $region29: #{tpu_custom_call.1} parent=1 // pred_fallthru
      _
    %131 = vsyncpa [#allocation3], 1
    %132 = vsyncpa [#allocation5], 1

</llo_original>
